<compile_context>
chip_gen: v7x
topology: tpu7x:2x2x1
jax: 0.10.0
libtpu: 0.0.40
codegen_flags: <defaults>
</compile_context>

<pallas_src>
import jax
import jax.numpy as jnp
from jax.experimental import pallas as pl
from jax.experimental.pallas import tpu as pltpu


def _square_kernel(x_ref, o_ref):
    x = x_ref[...]
    o_ref[...] = x * x


# Native sublane packing per element size (bytes -> rows per (_,128) vreg tile).
_SUBLANE_MULT = {4: 8, 2: 16, 1: 32}

# Candidate slab widths (lane-dense: all multiples of 128), widest first.
_WIDTHS = (8192, 4096, 2048, 1024, 512, 256, 128)

# Below this many bytes, fused XLA elementwise beats kernel launch overhead.
_SMALL_BYTES = 4 << 20  # 4 MiB

# Scoped-VMEM ceiling we request. 32 MiB is well within physical VMEM on
# v5e/v6e (128 MiB) and v7x (64 MiB per TensorCore) and covers the worst-case
# residency of 4 x block_bytes (input + output, double-buffered) + headroom.
_VMEM_LIMIT_BYTES = 32 << 20


def _pick_block_bytes() -> int:
    """Generation-aware per-grid-step input tile size (bytes)."""
    block = 4 << 20  # v5e / v6e default: 4 x 4 MiB = 16 MiB resident.
    try:
        info = pltpu.get_tpu_info()
        vmem = int(getattr(info, "vmem_capacity_bytes", 128 << 20))
        if vmem <= (80 << 20):
            # v7x (64 MiB VMEM/TC, 3.2 TB/s HBM): bigger blocks cut the fixed
            # ~0.35 us per-step overhead from ~25% to <10% of the block time.
            block = 6 << 20
    except Exception:
        pass
    return block


def square(
    x: jax.Array,
    *,
    block_bytes: int | None = None,
    force_pallas: bool = False,
) -> jax.Array:
    """Elementwise square (torch.pow(x, 2)) via a Pallas TPU kernel."""
    orig_shape = x.shape
    dtype = x.dtype
    n = x.size
    if n == 0:
        return x

    itemsize = jnp.dtype(dtype).itemsize

    # Small-input fast path: fused XLA elementwise beats kernel launch overhead.
    if not force_pallas and n * itemsize < _SMALL_BYTES:
        return x * x

    # ---- choose a lane-dense slab width that divides n exactly --------------
    width = None
    for w in _WIDTHS:
        if n % w == 0:
            width = w
            break
    if width is None:
        # Ragged element count: avoid the pad/slice HBM round-trips entirely.
        # XLA's fused x*x already sits at the HBM roofline for this op.
        return x * x

    rows = n // width
    x2d = jnp.reshape(x, (rows, width))

    # ---- choose row tile: ~block_bytes per block, dtype-aware sublane pack --
    if block_bytes is None:
        block_bytes = _pick_block_bytes()
    sub = _SUBLANE_MULT.get(itemsize, 8)
    tr = max((block_bytes // (width * itemsize)) // sub * sub, sub)
    if rows <= tr:
        # Split into >=2 grid steps when possible so ("parallel",) semantics
        # can use both TensorCores on v7x; tiny inputs stay a single
        # full-extent block (always a legal block shape).
        half = (pl.cdiv(rows, 2) + sub - 1) // sub * sub
        tr = half if half < rows else rows
    # cdiv grid: a ragged last block is fine (out-of-bounds writes are masked
    # and the op is elementwise, so garbage reads are harmless).
    num_blocks = pl.cdiv(rows, tr)

    out2d = pl.pallas_call(
        _square_kernel,
        out_shape=jax.ShapeDtypeStruct((rows, width), dtype),
        grid_spec=pltpu.PrefetchScalarGridSpec(
            num_scalar_prefetch=0,
            grid=(num_blocks,),
            in_specs=[pl.BlockSpec((tr, width), lambda i: (i, 0))],
            out_specs=pl.BlockSpec((tr, width), lambda i: (i, 0)),
        ),
        compiler_params=pltpu.CompilerParams(
            dimension_semantics=("parallel",),
            vmem_limit_bytes=_VMEM_LIMIT_BYTES,
        ),
        cost_estimate=pl.CostEstimate(
            flops=n,
            transcendentals=0,
            bytes_accessed=2 * n * itemsize,
        ),
    )(x2d)

    return jnp.reshape(out2d, orig_shape)


if __name__ == "__main__":
    key = jax.random.PRNGKey(0)
    k1, k2, k3, k4 = jax.random.split(key, 4)

    # Typical Square_Layer input: (batch, channels, H, W). Force the kernel
    # path so the Pallas kernel is exercised even though this tensor is tiny
    # (single full-extent block).
    x = jax.random.normal(k1, (2, 4, 16, 16), dtype=jnp.float32)
    y = square(x, force_pallas=True)
    jax.block_until_ready(y)
    assert y.shape == x.shape and y.dtype == x.dtype
    assert jnp.allclose(y, x * x, rtol=1e-6, atol=1e-6)

    # Mid-size f32 input: exercises the >=2-grid-step split (both TCs on v7x).
    xm = jax.random.normal(k2, (2, 64, 1024), dtype=jnp.float32)
    ym = square(xm, force_pallas=True)
    jax.block_until_ready(ym)
    assert ym.shape == xm.shape and ym.dtype == xm.dtype
    assert jnp.allclose(ym, xm * xm, rtol=1e-6, atol=1e-6)

    # bf16 input with a multi-block grid (dtype-aware sublane packing + cdiv
    # tiling via a small block-size override).
    xb = jax.random.normal(k3, (4, 64, 1024), dtype=jnp.bfloat16)
    yb = square(xb, force_pallas=True, block_bytes=128 * 1024)
    jax.block_until_ready(yb)
    assert yb.shape == xb.shape and yb.dtype == xb.dtype
    assert jnp.allclose(
        yb.astype(jnp.float32), (xb * xb).astype(jnp.float32), rtol=1e-2, atol=1e-2
    )

    # Ragged element count: takes the XLA fallback (no pad/slice HBM passes),
    # semantics identical to torch.pow(x, 2).
    xr = jax.random.normal(k4, (3, 5, 7), dtype=jnp.float32)
    yr = square(xr, force_pallas=True)
    jax.block_until_ready(yr)
    assert yr.shape == xr.shape and yr.dtype == xr.dtype
    assert jnp.allclose(yr, xr * xr, rtol=1e-6, atol=1e-6)

    print("KERNEL_OK")
</pallas_src>

<mosaic_0001>
module attributes {stable_mosaic.version = 11 : i64} {
  func.func @_square_kernel(%arg0: i32, %arg1: memref<1x2048xf32, #tpu.memory_space<vmem>>, %arg2: memref<1x2048xf32, #tpu.memory_space<vmem>>) attributes {dimension_semantics = [#tpu.dimension_semantics<parallel>], iteration_bounds = array<i64: 1>, scalar_prefetch = 0 : i64, scratch_operands = 0 : i64, tpu.core_type = #tpu.core_type<tc>, window_params = [{transform_indices = @transform_0, window_bounds = array<i64: 1, 2048>}, {transform_indices = @transform_1, window_bounds = array<i64: 1, 2048>}]} {
    %c0 = arith.constant 0 : index
    %c0_0 = arith.constant 0 : index
    %0 = vector.load %arg1[%c0, %c0_0] : memref<1x2048xf32, #tpu.memory_space<vmem>>, vector<1x2048xf32>
    %1 = arith.mulf %0, %0 : vector<1x2048xf32>
    %c0_1 = arith.constant 0 : index
    %c0_2 = arith.constant 0 : index
    %2 = vector.load %arg2[%c0_1, %c0_2] : memref<1x2048xf32, #tpu.memory_space<vmem>>, vector<1x2048xf32>
    tpu.vector_store %arg2[%c0_1, %c0_2], %1 {strides = array<i32>} : memref<1x2048xf32, #tpu.memory_space<vmem>>, vector<1x2048xf32>,
    return
  }
  func.func @transform_0(%arg0: i32) -> (i32, i32) {
    %c0_i32 = arith.constant 0 : i32
    %c0_i32_0 = arith.constant 0 : i32
    return %arg0, %c0_i32 : i32, i32
  }
  func.func @transform_1(%arg0: i32) -> (i32, i32) {
    %c0_i32 = arith.constant 0 : i32
    %c0_i32_0 = arith.constant 0 : i32
    return %arg0, %c0_i32 : i32, i32
  }
}

</mosaic_0001>

<llo_original>
// kernel: tpu_custom_call.1
$region0: #{tpu_custom_call.1}
  #allocation0 [shape = 'u32[]', space=smem, size = 0x4, offset = 0x4, fixed_abs, tag = 'smem constant byte address 0x4 - core index']
  #allocation1 [shape = 'u32[144,128]{1,0:T(1,128)}', space=vmem, size = 0x12000, scoped, tag = 'internal scratch']
  %s0 = inlined_call_operand.hbm [shape: f32[1,2048], index: 0, kind: input, shape index: {}]
  %s1 = inlined_call_operand.hbm [shape: f32[1,2048], index: 1, kind: output, shape index: {}]
  %s2 = sld [smem:[#allocation0]]
  $region18: #{tpu_custom_call.1} parent=0
    _
  %s4 = ssub.s32 1, %s2
  %s5 = scalar_select 0, %s4, %s2
  $region1: #{tpu_custom_call.1} parent=0
    #allocation2 [shape = 'u8[8192]{0}', space=vmem, size = 0x2000, scoped, tag = 'input window, operand 0, single buffered']
    #allocation3 [shape = 's32[1]{0}', space=sflag, size = 0x4, scoped, tag = 'scoped memory for tpu_custom_call.1']
    #allocation4 [shape = 's32[1]{0}', space=sflag, size = 0x4, scoped, tag = 'scoped memory for tpu_custom_call.1']
    #allocation5 [shape = 'u8[8192]{0}', space=vmem, size = 0x2000, scoped, tag = 'output window, operand 0, single buffered']
    %6 = vsyncpa [#allocation3], 0
    %7 = vsyncpa [#allocation4], 0
    // Predicated region
    $region2: #{tpu_custom_call.1} parent=1 // pred_check
      _
    $region3: #{tpu_custom_call.1} parent=1 // pred_check_branch
      %9 = sbr.rel (0) target = $region5
    $region4: #{tpu_custom_call.1} parent=1 // pred_region
      %s11 = ssub.s32 256, 256
      %12 = vsyncadd [#allocation3], %s11
      %s14 = sshll.u32 [#allocation2], 4
      %s15 = int_to_ptr.vmem [resolvable:$true] %s14
      %17 = dma.hbm_to_vmem [thread:$0]  %s0, 256, %s15, [#allocation3]
    $region5: #{tpu_custom_call.1} parent=1 // pred_fallthru
      _
    // Predicated region
    $region6: #{tpu_custom_call.1} parent=1 // pred_check
      _
    $region7: #{tpu_custom_call.1} parent=1 // pred_check_branch
      %19 = sbr.rel (0) target = $region9
    $region8: #{tpu_custom_call.1} parent=1 // pred_region
      %20 = dma.done [#allocation3], 256
    $region9: #{tpu_custom_call.1} parent=1 // pred_fallthru
      _
    %v21 = vld [vmem:[#allocation2] sm:$0xff]
    %v22 = vld [vmem:[#allocation2 + $0x8] sm:$0xff]
    %v23 = vmul.f32 %v21, %v21
    %v24 = vmul.f32 %v22, %v22
    %25 = vst [vmem:[#allocation5] sm:$0xff] %v23
    %26 = vst [vmem:[#allocation5 + $0x8] sm:$0xff] %v24
    // Predicated region
    $region10: #{tpu_custom_call.1} parent=1 // pred_check
      _
    $region11: #{tpu_custom_call.1} parent=1 // pred_check_branch
      %28 = sbr.rel (0) target = $region13
    $region12: #{tpu_custom_call.1} parent=1 // pred_region
      %s30 = ssub.s32 256, 256
      %31 = vsyncadd [#allocation4], %s30
      %s33 = sshll.u32 [#allocation5], 4
      %s34 = int_to_ptr.vmem [resolvable:$true] %s33
      %36 = dma.vmem_to_hbm [thread:$0]  %s34, 256, %s1, [#allocation4]
    $region13: #{tpu_custom_call.1} parent=1 // pred_fallthru
      _
    // Predicated region
    $region14: #{tpu_custom_call.1} parent=1 // pred_check
      _
    $region15: #{tpu_custom_call.1} parent=1 // pred_check_branch
      %38 = sbr.rel (0) target = $region17
    $region16: #{tpu_custom_call.1} parent=1 // pred_region
      %39 = dma.done [#allocation4], 256
    $region17: #{tpu_custom_call.1} parent=1 // pred_fallthru
      _
    %40 = vsyncpa [#allocation3], 1
    %41 = vsyncpa [#allocation4], 1

</llo_original>
